<compile_context>
chip_gen: v5e
topology: v5e:2x2
jax: 0.10.0
libtpu: 0.0.40
codegen_flags: <defaults>
</compile_context>

<pallas_src>
import functools

import numpy as np
import jax
import jax.numpy as jnp
from jax.experimental import pallas as pl
from jax.experimental.pallas import tpu as pltpu

NOTE_ON_START = 0
NOTE_OFF_START = 128
TIME_SHIFT_START = 256
VELOCITY_START = 768
_CRITICAL_TIMES = (4, 8, 16, 32)


def create_token_weights(vocab_size=774, note_weight=3.0, time_weight=2.0,
                         velocity_weight=1.5):
    """Reference re-implementation of _create_token_weights (verification only)."""
    w = np.ones(vocab_size, dtype=np.float32)
    w[NOTE_ON_START:NOTE_OFF_START] = note_weight
    w[NOTE_OFF_START:TIME_SHIFT_START] = note_weight * 0.7
    w[TIME_SHIFT_START:VELOCITY_START] = time_weight
    w[VELOCITY_START:] = velocity_weight
    for t in _CRITICAL_TIMES:
        if TIME_SHIFT_START + t < VELOCITY_START:
            w[TIME_SHIFT_START + t] *= 1.5
    return w


def _loss_kernel(n_rows, row_tile, strip, tiles_per_core, two_axis,
                 musical_weighting, note_w, time_w, vel_w,
                 logits_ref, tgt_ref, out_ref,
                 acc_ce, acc_wce, acc_nce, acc_ncnt):
    """One row block: strip-streamed fused cross-entropy; sums into VMEM scratch."""
    if two_axis:
        c = pl.program_id(0)
        i = pl.program_id(1)
        block_idx = c * tiles_per_core + i          # *intended* (unclamped) block
        num_i = pl.num_programs(1)
    else:
        i = pl.program_id(0)
        block_idx = i
        num_i = pl.num_programs(0)

    @pl.when(i == 0)
    def _zero():
        acc_ce[...] = jnp.zeros_like(acc_ce)
        acc_wce[...] = jnp.zeros_like(acc_wce)
        acc_nce[...] = jnp.zeros_like(acc_nce)
        acc_ncnt[...] = jnp.zeros_like(acc_ncnt)

    v = logits_ref.shape[-1]
    n_strips = row_tile // strip
    row0 = block_idx * row_tile

    # Hoisted out of the strip loop (JAX does not CSE broadcast_in_dim).
    lane_iota = jax.lax.broadcasted_iota(jnp.int32, (strip, v), 1)
    sub_iota = jax.lax.broadcasted_iota(jnp.int32, (strip, 1), 0)

    def strip_body(s, carry):
        b_ce, b_wce, b_nce, b_ncnt = carry
        r = pl.multiple_of(s * strip, strip)
        x = logits_ref[pl.ds(r, strip), :].astype(jnp.float32)     # (strip, V)
        tgt = tgt_ref[pl.ds(r, strip), :]                          # (strip, 1) i32

        # Rows past n_rows (ragged tail / clamped duplicate block) are masked with
        # selects so garbage NaN/Inf in the padding can never leak into the sums.
        valid = (row0 + s * strip + sub_iota) < n_rows             # (strip, 1)

        # Fused CE: one VMEM read of the strip feeds max, exp-sum and the one-hot
        # target gather; all temporaries are strip-sized and stay in vregs.
        m = jnp.max(x, axis=-1, keepdims=True)
        xs = x - m
        denom = jnp.sum(jnp.exp(xs), axis=-1, keepdims=True)
        tgt_rel = jnp.sum(jnp.where(lane_iota == tgt, xs, 0.0),
                          axis=-1, keepdims=True)                  # x[tgt] - m
        ce = jnp.where(valid, jnp.log(denom) - tgt_rel, 0.0)       # lse - x[tgt]
        # TODO(synk): out-of-range / ignore-index targets (e.g. -100) still add
        # their lse term, matching the reference module (not torch ignore_index).

        b_ce = b_ce + ce
        if musical_weighting:
            tw = jnp.where(tgt < NOTE_OFF_START, note_w,
                 jnp.where(tgt < TIME_SHIFT_START, note_w * 0.7,
                 jnp.where(tgt < VELOCITY_START, time_w, vel_w))).astype(jnp.float32)
            crit = ((tgt == TIME_SHIFT_START + 4) | (tgt == TIME_SHIFT_START + 8) |
                    (tgt == TIME_SHIFT_START + 16) | (tgt == TIME_SHIFT_START + 32))
            tw = jnp.where(crit, tw * 1.5, tw)
            note = jnp.where(
                jnp.logical_and(valid,
                                jnp.logical_and(tgt >= NOTE_ON_START,
                                                tgt < NOTE_OFF_START)),
                1.0, 0.0).astype(jnp.float32)
            b_wce = b_wce + ce * tw
            b_nce = b_nce + ce * note
            b_ncnt = b_ncnt + note
        return b_ce, b_wce, b_nce, b_ncnt

    zcol = jnp.zeros((strip, 1), jnp.float32)
    b_ce, b_wce, b_nce, b_ncnt = jax.lax.fori_loop(
        0, n_strips, strip_body, (zcol, zcol, zcol, zcol))

    # Per-block update of the cross-step accumulators (4 tiny vreg adds).
    acc_ce[...] += b_ce
    acc_wce[...] += b_wce
    acc_nce[...] += b_nce
    acc_ncnt[...] += b_ncnt

    # Epilogue only on the last grid step: reduce the column accumulators and
    # build the lane-dense output block once.
    @pl.when(i == num_i - 1)
    def _finalize():
        lane = jax.lax.broadcasted_iota(jnp.int32, out_ref.shape,
                                        len(out_ref.shape) - 1)
        out_ref[...] = jnp.where(lane == 0, jnp.sum(acc_ce[...]),
                       jnp.where(lane == 1, jnp.sum(acc_wce[...]),
                       jnp.where(lane == 2, jnp.sum(acc_nce[...]),
                       jnp.where(lane == 3, jnp.sum(acc_ncnt[...]), 0.0))))


def perceptual_reconstruction_loss(
        logits, targets, mask=None, *,
        musical_weighting=True, perceptual_emphasis=2.0,
        note_weight=3.0, time_weight=2.0, velocity_weight=1.5,
        row_tile=2048, num_cores=1):
    """Forward pass of PerceptualReconstructionLoss; returns dict of f32 scalars."""
    B, S, V = logits.shape
    N = B * S

    logits_flat = logits.reshape(N, V)                  # metadata-only reshape
    targets_flat = targets.reshape(N, 1).astype(jnp.int32)

    itemsize = jnp.dtype(logits.dtype).itemsize
    strip = 32 if itemsize == 1 else 16                 # sublane packing safe for f32/bf16/int8
    rt = max(strip, (int(row_tile) // strip) * strip)   # row tile, strip-aligned
    rt = min(rt, ((N + strip - 1) // strip) * strip)    # don't tile past the data

    # Keep the double-buffered working set comfortably inside VMEM (v7x: 64 MiB).
    lanes_v = ((V + 127) // 128) * 128
    def _work_bytes(r):
        return 2 * r * (lanes_v * itemsize + 128 * 4)
    while rt > strip and _work_bytes(rt) > (36 << 20):
        rt = max(strip, (rt // 2 // strip) * strip)
    vmem_limit = int(min(max(2 * _work_bytes(rt), 32 << 20), 48 << 20))

    nb = pl.cdiv(N, rt)

    if num_cores <= 1:
        # Single-TensorCore chips (v5e/v6e): one reduction axis, no clamp,
        # no duplicated tail block.
        two_axis = False
        tiles_per_core = nb
        grid = (nb,)
        in_specs = [pl.BlockSpec((rt, V), lambda i: (i, 0)),
                    pl.BlockSpec((rt, 1), lambda i: (i, 0))]
        out_specs = pl.BlockSpec((1, 8, 128), lambda i: (0, 0, 0))
        out_shape = jax.ShapeDtypeStruct((1, 8, 128), jnp.float32)
        semantics = ("arbitrary",)
    else:
        # v7x: genuinely shard the block loop across TensorCores (CORE_PARALLEL).
        two_axis = True
        tiles_per_core = pl.cdiv(nb, num_cores)
        last_block = nb - 1

        def in_map(c, i):
            # Clamp so no block is fully out of bounds; the kernel masks the
            # duplicated tail block via the *unclamped* block index.
            return (jnp.minimum(c * tiles_per_core + i, last_block), 0)

        grid = (num_cores, tiles_per_core)
        in_specs = [pl.BlockSpec((rt, V), in_map),
                    pl.BlockSpec((rt, 1), in_map)]
        out_specs = pl.BlockSpec((1, 8, 128), lambda c, i: (c, 0, 0))
        out_shape = jax.ShapeDtypeStruct((num_cores, 8, 128), jnp.float32)
        semantics = (pltpu.CORE_PARALLEL, pltpu.ARBITRARY)

    kernel = functools.partial(
        _loss_kernel, N, rt, strip, int(tiles_per_core), two_axis,
        bool(musical_weighting), float(note_weight), float(time_weight),
        float(velocity_weight))

    out = pl.pallas_call(
        kernel,
        out_shape=out_shape,
        grid_spec=pltpu.PrefetchScalarGridSpec(
            num_scalar_prefetch=0,
            grid=grid,
            in_specs=in_specs,
            out_specs=out_specs,
            # Four (strip, 1) column accumulators persisting across grid steps.
            scratch_shapes=[pltpu.VMEM((strip, 1), jnp.float32)] * 4),
        compiler_params=pltpu.CompilerParams(
            dimension_semantics=semantics,
            vmem_limit_bytes=vmem_limit),
    )(logits_flat, targets_flat)

    # TODO(synk): plain f32 running sums; use Kahan/f32x2 if N reaches many millions.
    sums = jnp.sum(out[:, 0, :4], axis=0)               # per-core partials summed
    sum_ce, sum_wce, sum_nce, sum_ncnt = sums[0], sums[1], sums[2], sums[3]
    n = jnp.asarray(float(N), jnp.float32)

    base = sum_ce / n
    losses = {"base_reconstruction": base}
    if musical_weighting:
        losses["perceptual_reconstruction"] = sum_wce / n
        losses["structure_emphasis"] = jnp.where(
            sum_ncnt > 0.0,
            sum_nce * jnp.float32(perceptual_emphasis) / n,
            jnp.float32(0.0))
    else:
        losses["perceptual_reconstruction"] = base
        losses["structure_emphasis"] = jnp.float32(0.0)

    # The reference `mask` branch only rescales entries with dim > 0; every loss
    # entry here is a 0-dim scalar, so it is a structural no-op — mirrored here.
    losses["total"] = (losses["perceptual_reconstruction"]
                       + 0.1 * losses["structure_emphasis"])
    return losses


def _reference(logits, targets, perceptual_emphasis=2.0):
    """Pure-JAX reference mirroring the PyTorch forward (for verification)."""
    lf = logits.astype(jnp.float32)
    logp = jax.nn.log_softmax(lf, axis=-1)
    ce = -jnp.take_along_axis(logp, targets[..., None].astype(jnp.int32),
                              axis=-1)[..., 0]
    tw = jnp.asarray(create_token_weights(logits.shape[-1]))[targets]
    base = ce.mean()
    perc = (ce * tw).mean()
    note = ((targets >= NOTE_ON_START) & (targets < NOTE_OFF_START)).astype(jnp.float32)
    struct = jnp.where(note.sum() == 0, 0.0,
                       (ce * note).mean() * perceptual_emphasis)
    return {"base_reconstruction": base,
            "perceptual_reconstruction": perc,
            "structure_emphasis": struct,
            "total": perc + 0.1 * struct}


def _check(got, ref, rtol=5e-4, atol=1e-4):
    for k in ("base_reconstruction", "perceptual_reconstruction",
              "structure_emphasis", "total"):
        np.testing.assert_allclose(np.asarray(got[k]), np.asarray(ref[k]),
                                   rtol=rtol, atol=atol, err_msg=k)


if __name__ == "__main__":
    key = jax.random.PRNGKey(0)
    ks = jax.random.split(key, 6)
    V = 774

    # Test 1: module-spec small shape (B=2, S=8), f32 logits, default tiling.
    logits1 = jax.random.normal(ks[0], (2, 8, V), dtype=jnp.float32)
    targets1 = jax.random.randint(ks[1], (2, 8), 0, V, dtype=jnp.int32)
    got1 = perceptual_reconstruction_loss(logits1, targets1)
    _check(got1, _reference(logits1, targets1))

    # Test 1b: musical_weighting=False branch.
    got1b = perceptual_reconstruction_loss(logits1, targets1,
                                           musical_weighting=False)
    np.testing.assert_allclose(np.asarray(got1b["perceptual_reconstruction"]),
                               np.asarray(_reference(logits1, targets1)["base_reconstruction"]),
                               rtol=5e-4, atol=1e-4)
    np.testing.assert_allclose(np.asarray(got1b["structure_emphasis"]), 0.0)

    # Test 2: ragged row count (N=21) + tiny row_tile -> 2 blocks, masked tail.
    logits2 = jax.random.normal(ks[2], (3, 7, V), dtype=jnp.float32)
    targets2 = jax.random.randint(ks[3], (3, 7), 0, V, dtype=jnp.int32)
    got2 = perceptual_reconstruction_loss(logits2, targets2, row_tile=16)
    _check(got2, _reference(logits2, targets2))

    # Test 3: bf16 logits over multiple blocks + multi-strip inner loop.
    logits3 = jax.random.normal(ks[4], (4, 128, V), dtype=jnp.bfloat16)
    targets3 = jax.random.randint(ks[5], (4, 128), 0, V, dtype=jnp.int32)
    got3 = perceptual_reconstruction_loss(logits3, targets3, row_tile=128)
    _check(got3, _reference(logits3, targets3))

    jax.block_until_ready(got3["total"])
    print("KERNEL_OK")
</pallas_src>

<mosaic_0001>
module attributes {stable_mosaic.version = 11 : i64} {
  func.func @_loss_kernel(%arg0: i32, %arg1: memref<16x774xf32, #tpu.memory_space<vmem>>, %arg2: memref<16x1xi32, #tpu.memory_space<vmem>>, %arg3: memref<1x8x128xf32, #tpu.memory_space<vmem>>, %arg4: memref<16x1xf32, #tpu.memory_space<vmem>>, %arg5: memref<16x1xf32, #tpu.memory_space<vmem>>, %arg6: memref<16x1xf32, #tpu.memory_space<vmem>>, %arg7: memref<16x1xf32, #tpu.memory_space<vmem>>) attributes {dimension_semantics = [#tpu.dimension_semantics<arbitrary>], iteration_bounds = array<i64: 1>, scalar_prefetch = 0 : i64, scratch_operands = 4 : i64, tpu.core_type = #tpu.core_type<tc>, window_params = [{transform_indices = @transform_0, window_bounds = array<i64: 16, 774>}, {transform_indices = @transform_1, window_bounds = array<i64: 16, 1>}, {pipeline_mode = #tpu.pipeline_mode<synchronous>, transform_indices = @transform_2, window_bounds = array<i64: 1, 8, 128>}]} {
    %c0_i32 = arith.constant 0 : i32
    %0 = arith.cmpi eq, %arg0, %c0_i32 : i32
    %1 = arith.extui %0 : i1 to i32
    %c0_i32_0 = arith.constant 0 : i32
    %2 = arith.cmpi ne, %1, %c0_i32_0 : i32
    scf.if %2 {
      %cst_38 = arith.constant 0.000000e+00 : f32
      %93 = vector.broadcast %cst_38 : f32 to vector<16x1xf32>
      %c0_39 = arith.constant 0 : index
      %c0_40 = arith.constant 0 : index
      %94 = vector.load %arg4[%c0_39, %c0_40] : memref<16x1xf32, #tpu.memory_space<vmem>>, vector<16x1xf32>
      tpu.vector_store %arg4[%c0_39, %c0_40], %93 {strides = array<i32>} : memref<16x1xf32, #tpu.memory_space<vmem>>, vector<16x1xf32>,
      %cst_41 = arith.constant 0.000000e+00 : f32
      %95 = vector.broadcast %cst_41 : f32 to vector<16x1xf32>
      %c0_42 = arith.constant 0 : index
      %c0_43 = arith.constant 0 : index
      %96 = vector.load %arg5[%c0_42, %c0_43] : memref<16x1xf32, #tpu.memory_space<vmem>>, vector<16x1xf32>
      tpu.vector_store %arg5[%c0_42, %c0_43], %95 {strides = array<i32>} : memref<16x1xf32, #tpu.memory_space<vmem>>, vector<16x1xf32>,
      %cst_44 = arith.constant 0.000000e+00 : f32
      %97 = vector.broadcast %cst_44 : f32 to vector<16x1xf32>
      %c0_45 = arith.constant 0 : index
      %c0_46 = arith.constant 0 : index
      %98 = vector.load %arg6[%c0_45, %c0_46] : memref<16x1xf32, #tpu.memory_space<vmem>>, vector<16x1xf32>
      tpu.vector_store %arg6[%c0_45, %c0_46], %97 {strides = array<i32>} : memref<16x1xf32, #tpu.memory_space<vmem>>, vector<16x1xf32>,
      %cst_47 = arith.constant 0.000000e+00 : f32
      %99 = vector.broadcast %cst_47 : f32 to vector<16x1xf32>
      %c0_48 = arith.constant 0 : index
      %c0_49 = arith.constant 0 : index
      %100 = vector.load %arg7[%c0_48, %c0_49] : memref<16x1xf32, #tpu.memory_space<vmem>>, vector<16x1xf32>
      tpu.vector_store %arg7[%c0_48, %c0_49], %99 {strides = array<i32>} : memref<16x1xf32, #tpu.memory_space<vmem>>, vector<16x1xf32>,
    } else {
    }
    %c16_i32 = arith.constant 16 : i32
    %3 = arith.muli %arg0, %c16_i32 : i32
    %4 = tpu.iota {dimensions = array<i32: 1>} : vector<16x774xi32>
    %5 = tpu.iota {dimensions = array<i32: 0>} : vector<16x1xi32>
    %cst = arith.constant 0.000000e+00 : f32
    %6 = vector.broadcast %cst : f32 to vector<16x1xf32>
    %c0_i32_1 = arith.constant 0 : i32
    %c16_i32_2 = arith.constant 16 : i32
    %7 = arith.muli %c0_i32_1, %c16_i32_2 : i32
    %8 = tpu.assume_multiple %7, 16 : i32
    %9 = arith.index_cast %8 : i32 to index
    %c0 = arith.constant 0 : index
    %10 = vector.load %arg1[%9, %c0] : memref<16x774xf32, #tpu.memory_space<vmem>>, vector<16x774xf32>
    %11 = arith.index_cast %8 : i32 to index
    %c0_3 = arith.constant 0 : index
    %12 = vector.load %arg2[%11, %c0_3] : memref<16x1xi32, #tpu.memory_space<vmem>>, vector<16x1xi32>
    %c16_i32_4 = arith.constant 16 : i32
    %13 = arith.muli %c0_i32_1, %c16_i32_4 : i32
    %14 = arith.addi %3, %13 : i32
    %15 = vector.broadcast %14 : i32 to vector<16x1xi32>
    %16 = arith.addi %15, %5 : vector<16x1xi32>
    %c16_i32_5 = arith.constant 16 : i32
    %17 = vector.broadcast %c16_i32_5 : i32 to vector<16x1xi32>
    %18 = arith.cmpi slt, %16, %17 : vector<16x1xi32>
    %cst_6 = arith.constant dense<0xFF800000> : vector<16xf32>
    %19 = vector.multi_reduction <maximumf>, %10, %cst_6 [1] : vector<16x774xf32> to vector<16xf32>
    %20 = vector.shape_cast %19 : vector<16xf32> to vector<16x1xf32>
    %21 = vector.broadcast %20 : vector<16x1xf32> to vector<16x774xf32>
    %22 = arith.subf %10, %21 : vector<16x774xf32>
    %23 = math.exp %22 : vector<16x774xf32>
    %cst_7 = arith.constant dense<0.000000e+00> : vector<16xf32>
    %24 = vector.multi_reduction <add>, %23, %cst_7 [1] : vector<16x774xf32> to vector<16xf32>
    %25 = vector.shape_cast %24 : vector<16xf32> to vector<16x1xf32>
    %26 = vector.broadcast %12 : vector<16x1xi32> to vector<16x774xi32>
    %27 = arith.cmpi eq, %4, %26 : vector<16x774xi32>
    %cst_8 = arith.constant 0.000000e+00 : f32
    %28 = vector.broadcast %cst_8 : f32 to vector<16x774xf32>
    %29 = arith.select %27, %22, %28 : vector<16x774xi1>, vector<16x774xf32>
    %cst_9 = arith.constant dense<0.000000e+00> : vector<16xf32>
    %30 = vector.multi_reduction <add>, %29, %cst_9 [1] : vector<16x774xf32> to vector<16xf32>
    %31 = vector.shape_cast %30 : vector<16xf32> to vector<16x1xf32>
    %32 = math.log %25 : vector<16x1xf32>
    %33 = arith.subf %32, %31 : vector<16x1xf32>
    %cst_10 = arith.constant 0.000000e+00 : f32
    %34 = vector.broadcast %cst_10 : f32 to vector<16x1xf32>
    %35 = arith.select %18, %33, %34 : vector<16x1xi1>, vector<16x1xf32>
    %36 = arith.addf %6, %35 : vector<16x1xf32>
    %c128_i32 = arith.constant 128 : i32
    %37 = vector.broadcast %c128_i32 : i32 to vector<16x1xi32>
    %38 = arith.cmpi slt, %12, %37 : vector<16x1xi32>
    %c256_i32 = arith.constant 256 : i32
    %39 = vector.broadcast %c256_i32 : i32 to vector<16x1xi32>
    %40 = arith.cmpi slt, %12, %39 : vector<16x1xi32>
    %c768_i32 = arith.constant 768 : i32
    %41 = vector.broadcast %c768_i32 : i32 to vector<16x1xi32>
    %42 = arith.cmpi slt, %12, %41 : vector<16x1xi32>
    %cst_11 = arith.constant 2.000000e+00 : f32
    %cst_12 = arith.constant 1.500000e+00 : f32
    %43 = vector.broadcast %cst_11 : f32 to vector<16x1xf32>
    %44 = vector.broadcast %cst_12 : f32 to vector<16x1xf32>
    %45 = arith.select %42, %43, %44 : vector<16x1xi1>, vector<16x1xf32>
    %cst_13 = arith.constant 2.100000e+00 : f32
    %46 = vector.broadcast %cst_13 : f32 to vector<16x1xf32>
    %47 = arith.select %40, %46, %45 : vector<16x1xi1>, vector<16x1xf32>
    %cst_14 = arith.constant 3.000000e+00 : f32
    %48 = vector.broadcast %cst_14 : f32 to vector<16x1xf32>
    %49 = arith.select %38, %48, %47 : vector<16x1xi1>, vector<16x1xf32>
    %c260_i32 = arith.constant 260 : i32
    %50 = vector.broadcast %c260_i32 : i32 to vector<16x1xi32>
    %51 = arith.cmpi eq, %12, %50 : vector<16x1xi32>
    %c264_i32 = arith.constant 264 : i32
    %52 = vector.broadcast %c264_i32 : i32 to vector<16x1xi32>
    %53 = arith.cmpi eq, %12, %52 : vector<16x1xi32>
    %54 = arith.ori %51, %53 : vector<16x1xi1>
    %c272_i32 = arith.constant 272 : i32
    %55 = vector.broadcast %c272_i32 : i32 to vector<16x1xi32>
    %56 = arith.cmpi eq, %12, %55 : vector<16x1xi32>
    %57 = arith.ori %54, %56 : vector<16x1xi1>
    %c288_i32 = arith.constant 288 : i32
    %58 = vector.broadcast %c288_i32 : i32 to vector<16x1xi32>
    %59 = arith.cmpi eq, %12, %58 : vector<16x1xi32>
    %60 = arith.ori %57, %59 : vector<16x1xi1>
    %cst_15 = arith.constant 1.500000e+00 : f32
    %61 = vector.broadcast %cst_15 : f32 to vector<16x1xf32>
    %62 = arith.mulf %49, %61 : vector<16x1xf32>
    %63 = arith.select %60, %62, %49 : vector<16x1xi1>, vector<16x1xf32>
    %c0_i32_16 = arith.constant 0 : i32
    %64 = vector.broadcast %c0_i32_16 : i32 to vector<16x1xi32>
    %65 = arith.cmpi sge, %12, %64 : vector<16x1xi32>
    %c128_i32_17 = arith.constant 128 : i32
    %66 = vector.broadcast %c128_i32_17 : i32 to vector<16x1xi32>
    %67 = arith.cmpi slt, %12, %66 : vector<16x1xi32>
    %68 = arith.andi %65, %67 : vector<16x1xi1>
    %69 = arith.andi %18, %68 : vector<16x1xi1>
    %cst_18 = arith.constant 1.000000e+00 : f32
    %cst_19 = arith.constant 0.000000e+00 : f32
    %70 = vector.broadcast %cst_18 : f32 to vector<16x1xf32>
    %71 = vector.broadcast %cst_19 : f32 to vector<16x1xf32>
    %72 = arith.select %69, %70, %71 : vector<16x1xi1>, vector<16x1xf32>
    %73 = arith.mulf %35, %63 : vector<16x1xf32>
    %74 = arith.addf %6, %73 : vector<16x1xf32>
    %75 = arith.mulf %35, %72 : vector<16x1xf32>
    %76 = arith.addf %6, %75 : vector<16x1xf32>
    %77 = arith.addf %6, %72 : vector<16x1xf32>
    %c1_i32 = arith.constant 1 : i32
    %c0_20 = arith.constant 0 : index
    %c0_21 = arith.constant 0 : index
    %78 = vector.load %arg4[%c0_20, %c0_21] : memref<16x1xf32, #tpu.memory_space<vmem>>, vector<16x1xf32>
    %79 = arith.addf %78, %36 : vector<16x1xf32>
    %c0_22 = arith.constant 0 : index
    %c0_23 = arith.constant 0 : index
    %80 = vector.load %arg4[%c0_22, %c0_23] : memref<16x1xf32, #tpu.memory_space<vmem>>, vector<16x1xf32>
    tpu.vector_store %arg4[%c0_22, %c0_23], %79 {strides = array<i32>} : memref<16x1xf32, #tpu.memory_space<vmem>>, vector<16x1xf32>,
    %c0_24 = arith.constant 0 : index
    %c0_25 = arith.constant 0 : index
    %81 = vector.load %arg5[%c0_24, %c0_25] : memref<16x1xf32, #tpu.memory_space<vmem>>, vector<16x1xf32>
    %82 = arith.addf %81, %74 : vector<16x1xf32>
    %c0_26 = arith.constant 0 : index
    %c0_27 = arith.constant 0 : index
    %83 = vector.load %arg5[%c0_26, %c0_27] : memref<16x1xf32, #tpu.memory_space<vmem>>, vector<16x1xf32>
    tpu.vector_store %arg5[%c0_26, %c0_27], %82 {strides = array<i32>} : memref<16x1xf32, #tpu.memory_space<vmem>>, vector<16x1xf32>,
    %c0_28 = arith.constant 0 : index
    %c0_29 = arith.constant 0 : index
    %84 = vector.load %arg6[%c0_28, %c0_29] : memref<16x1xf32, #tpu.memory_space<vmem>>, vector<16x1xf32>
    %85 = arith.addf %84, %76 : vector<16x1xf32>
    %c0_30 = arith.constant 0 : index
    %c0_31 = arith.constant 0 : index
    %86 = vector.load %arg6[%c0_30, %c0_31] : memref<16x1xf32, #tpu.memory_space<vmem>>, vector<16x1xf32>
    tpu.vector_store %arg6[%c0_30, %c0_31], %85 {strides = array<i32>} : memref<16x1xf32, #tpu.memory_space<vmem>>, vector<16x1xf32>,
    %c0_32 = arith.constant 0 : index
    %c0_33 = arith.constant 0 : index
    %87 = vector.load %arg7[%c0_32, %c0_33] : memref<16x1xf32, #tpu.memory_space<vmem>>, vector<16x1xf32>
    %88 = arith.addf %87, %77 : vector<16x1xf32>
    %c0_34 = arith.constant 0 : index
    %c0_35 = arith.constant 0 : index
    %89 = vector.load %arg7[%c0_34, %c0_35] : memref<16x1xf32, #tpu.memory_space<vmem>>, vector<16x1xf32>
    tpu.vector_store %arg7[%c0_34, %c0_35], %88 {strides = array<i32>} : memref<16x1xf32, #tpu.memory_space<vmem>>, vector<16x1xf32>,
    %c0_i32_36 = arith.constant 0 : i32
    %90 = arith.cmpi eq, %arg0, %c0_i32_36 : i32
    %91 = arith.extui %90 : i1 to i32
    %c0_i32_37 = arith.constant 0 : i32
    %92 = arith.cmpi ne, %91, %c0_i32_37 : i32
    scf.if %92 {
      %93 = tpu.iota {dimensions = array<i32: 2>} : vector<1x8x128xi32>
      %c0_i32_38 = arith.constant 0 : i32
      %94 = vector.broadcast %c0_i32_38 : i32 to vector<1x8x128xi32>
      %95 = arith.cmpi eq, %93, %94 : vector<1x8x128xi32>
      %c0_39 = arith.constant 0 : index
      %c0_40 = arith.constant 0 : index
      %96 = vector.load %arg4[%c0_39, %c0_40] : memref<16x1xf32, #tpu.memory_space<vmem>>, vector<16x1xf32>
      %97 = vector.shape_cast %96 : vector<16x1xf32> to vector<1x16x1xf32>
      %cst_41 = arith.constant dense<0.000000e+00> : vector<1xf32>
      %98 = vector.multi_reduction <add>, %97, %cst_41 [1, 2] : vector<1x16x1xf32> to vector<1xf32>
      %99 = vector.shape_cast %98 : vector<1xf32> to vector<1x1x1xf32>
      %100 = vector.extract %99[0, 0, 0] : f32 from vector<1x1x1xf32>
      %c1_i32_42 = arith.constant 1 : i32
      %101 = vector.broadcast %c1_i32_42 : i32 to vector<1x8x128xi32>
      %102 = arith.cmpi eq, %93, %101 : vector<1x8x128xi32>
      %c0_43 = arith.constant 0 : index
      %c0_44 = arith.constant 0 : index
      %103 = vector.load %arg5[%c0_43, %c0_44] : memref<16x1xf32, #tpu.memory_space<vmem>>, vector<16x1xf32>
      %104 = vector.shape_cast %103 : vector<16x1xf32> to vector<1x16x1xf32>
      %cst_45 = arith.constant dense<0.000000e+00> : vector<1xf32>
      %105 = vector.multi_reduction <add>, %104, %cst_45 [1, 2] : vector<1x16x1xf32> to vector<1xf32>
      %106 = vector.shape_cast %105 : vector<1xf32> to vector<1x1x1xf32>
      %107 = vector.extract %106[0, 0, 0] : f32 from vector<1x1x1xf32>
      %c2_i32 = arith.constant 2 : i32
      %108 = vector.broadcast %c2_i32 : i32 to vector<1x8x128xi32>
      %109 = arith.cmpi eq, %93, %108 : vector<1x8x128xi32>
      %c0_46 = arith.constant 0 : index
      %c0_47 = arith.constant 0 : index
      %110 = vector.load %arg6[%c0_46, %c0_47] : memref<16x1xf32, #tpu.memory_space<vmem>>, vector<16x1xf32>
      %111 = vector.shape_cast %110 : vector<16x1xf32> to vector<1x16x1xf32>
      %cst_48 = arith.constant dense<0.000000e+00> : vector<1xf32>
      %112 = vector.multi_reduction <add>, %111, %cst_48 [1, 2] : vector<1x16x1xf32> to vector<1xf32>
      %113 = vector.shape_cast %112 : vector<1xf32> to vector<1x1x1xf32>
      %114 = vector.extract %113[0, 0, 0] : f32 from vector<1x1x1xf32>
      %c3_i32 = arith.constant 3 : i32
      %115 = vector.broadcast %c3_i32 : i32 to vector<1x8x128xi32>
      %116 = arith.cmpi eq, %93, %115 : vector<1x8x128xi32>
      %c0_49 = arith.constant 0 : index
      %c0_50 = arith.constant 0 : index
      %117 = vector.load %arg7[%c0_49, %c0_50] : memref<16x1xf32, #tpu.memory_space<vmem>>, vector<16x1xf32>
      %118 = vector.shape_cast %117 : vector<16x1xf32> to vector<1x16x1xf32>
      %cst_51 = arith.constant dense<0.000000e+00> : vector<1xf32>
      %119 = vector.multi_reduction <add>, %118, %cst_51 [1, 2] : vector<1x16x1xf32> to vector<1xf32>
      %120 = vector.shape_cast %119 : vector<1xf32> to vector<1x1x1xf32>
      %121 = vector.extract %120[0, 0, 0] : f32 from vector<1x1x1xf32>
      %cst_52 = arith.constant 0.000000e+00 : f32
      %122 = vector.broadcast %121 : f32 to vector<1x8x128xf32>
      %123 = vector.broadcast %cst_52 : f32 to vector<1x8x128xf32>
      %124 = arith.select %116, %122, %123 : vector<1x8x128xi1>, vector<1x8x128xf32>
      %125 = vector.broadcast %114 : f32 to vector<1x8x128xf32>
      %126 = arith.select %109, %125, %124 : vector<1x8x128xi1>, vector<1x8x128xf32>
      %127 = vector.broadcast %107 : f32 to vector<1x8x128xf32>
      %128 = arith.select %102, %127, %126 : vector<1x8x128xi1>, vector<1x8x128xf32>
      %129 = vector.broadcast %100 : f32 to vector<1x8x128xf32>
      %130 = arith.select %95, %129, %128 : vector<1x8x128xi1>, vector<1x8x128xf32>
      %c0_53 = arith.constant 0 : index
      %c0_54 = arith.constant 0 : index
      %c0_55 = arith.constant 0 : index
      %131 = vector.load %arg3[%c0_53, %c0_54, %c0_55] : memref<1x8x128xf32, #tpu.memory_space<vmem>>, vector<1x8x128xf32>
      tpu.vector_store %arg3[%c0_53, %c0_54, %c0_55], %130 {strides = array<i32>} : memref<1x8x128xf32, #tpu.memory_space<vmem>>, vector<1x8x128xf32>,
    } else {
    }
    return
  }
  func.func @transform_0(%arg0: i32) -> (i32, i32) {
    %c0_i32 = arith.constant 0 : i32
    %c0_i32_0 = arith.constant 0 : i32
    return %arg0, %c0_i32 : i32, i32
  }
  func.func @transform_1(%arg0: i32) -> (i32, i32) {
    %c0_i32 = arith.constant 0 : i32
    %c0_i32_0 = arith.constant 0 : i32
    return %arg0, %c0_i32 : i32, i32
  }
  func.func @transform_2(%arg0: i32) -> (i32, i32, i32) {
    %c0_i32 = arith.constant 0 : i32
    %c0_i32_0 = arith.constant 0 : i32
    %c0_i32_1 = arith.constant 0 : i32
    %c0_i32_2 = arith.constant 0 : i32
    return %c0_i32, %c0_i32_0, %c0_i32_1 : i32, i32, i32
  }
}

</mosaic_0001>

<llo_original>
// kernel: tpu_custom_call.1
$region0: #{tpu_custom_call.1}
  #allocation0 [shape = 'u32[]', space=smem, size = 0x4, offset = 0x4, fixed_abs, tag = 'smem constant byte address 0x4 - core index']
  #allocation1 [shape = 'u32[72,128]{1,0:T(1,128)}', space=vmem, size = 0x9000, scoped, tag = 'internal scratch']
  #allocation2 [shape = 'f32[16,1]{1,0:T(8,128)}', space=vmem, size = 0x2000, scoped, tag = 'scratch operand']
  #allocation3 [shape = 'f32[16,1]{1,0:T(8,128)}', space=vmem, size = 0x2000, scoped, tag = 'scratch operand']
  #allocation4 [shape = 'f32[16,1]{1,0:T(8,128)}', space=vmem, size = 0x2000, scoped, tag = 'scratch operand']
  #allocation5 [shape = 'f32[16,1]{1,0:T(8,128)}', space=vmem, size = 0x2000, scoped, tag = 'scratch operand']
  %s0 = inlined_call_operand.hbm [shape: f32[16,774], index: 0, kind: input, shape index: {}]
  %s1 = inlined_call_operand.vmem [shape: s32[16,1], index: 1, kind: input, shape index: {}]
  %s2 = inlined_call_operand.hbm [shape: f32[1,8,128], index: 2, kind: output, shape index: {}]
  %s3 = sld [smem:[#allocation0]]
  $region30: #{tpu_custom_call.1} parent=0
    _
  %s5 = ssub.s32 1, %s3
  %s6 = scalar_select 0, %s5, %s3
  $region1: #{tpu_custom_call.1} parent=0
    #allocation6 [shape = 'u8[57344]{0}', space=vmem, size = 0xe000, scoped, tag = 'input window, operand 0, single buffered']
    #allocation7 [shape = 's32[1]{0}', space=sflag, size = 0x4, scoped, tag = 'scoped memory for tpu_custom_call.1']
    #allocation8 [shape = 's32[1]{0}', space=sflag, size = 0x4, scoped, tag = 'scoped memory for tpu_custom_call.1']
    #allocation9 [shape = 'u8[4096]{0}', space=vmem, size = 0x1000, scoped, tag = 'output window, operand 0, single buffered']
    %7 = vsyncpa [#allocation7], 0
    %8 = vsyncpa [#allocation8], 0
    // Predicated region
    $region2: #{tpu_custom_call.1} parent=1 // pred_check
      _
    $region3: #{tpu_custom_call.1} parent=1 // pred_check_branch
      %10 = sbr.rel (0) target = $region5
    $region4: #{tpu_custom_call.1} parent=1 // pred_region
      %12 = vsyncadd [#allocation7], 0
      %s13 = sshll.u32 %s0, 4
      %s14 = int_to_ptr.hbm [resolvable:$true] %s13
      %s15 = sshll.u32 [#allocation6], 4
      %s16 = int_to_ptr.vmem [resolvable:$true] %s15
      %21 = dma.hbm_to_vmem [thread:$0]  %s14, 1792, %s16, [#allocation7], 896, 896, 56
    $region5: #{tpu_custom_call.1} parent=1 // pred_fallthru
      _
    // Predicated region
    $region6: #{tpu_custom_call.1} parent=1 // pred_check
      _
    $region7: #{tpu_custom_call.1} parent=1 // pred_check_branch
      %23 = sbr.rel (0) target = $region9
    $region8: #{tpu_custom_call.1} parent=1 // pred_region
      _
    $region9: #{tpu_custom_call.1} parent=1 // pred_fallthru
      _
    // Predicated region
    $region10: #{tpu_custom_call.1} parent=1 // pred_check
      _
    $region11: #{tpu_custom_call.1} parent=1 // pred_check_branch
      %25 = sbr.rel (0) target = $region13
    $region12: #{tpu_custom_call.1} parent=1 // pred_region
      %27 = dma.done [#allocation7], 1792
    $region13: #{tpu_custom_call.1} parent=1 // pred_fallthru
      _
    %p28 = scmp.eq.s32.totalorder 0, 0
    // Predicated region
    $region14: #{tpu_custom_call.1} parent=1 // pred_check
      %p29 = pneg %p28
    $region15: #{tpu_custom_call.1} parent=1 // pred_check_branch
      %31 = sbr.rel (%p29) target = $region17
    $region16: #{tpu_custom_call.1} parent=1 // pred_region
      %vm32 = vcmask 7168
      %33 = vst.msk [vmem:[#allocation2] sm:$0xff] %vm32, 0.0
      %34 = vst.msk [vmem:[#allocation2 + $0x8] sm:$0xff] %vm32, 0.0
      %35 = vst.msk [vmem:[#allocation3] sm:$0xff] %vm32, 0.0
      %36 = vst.msk [vmem:[#allocation3 + $0x8] sm:$0xff] %vm32, 0.0
      %37 = vst.msk [vmem:[#allocation4] sm:$0xff] %vm32, 0.0
      %38 = vst.msk [vmem:[#allocation4 + $0x8] sm:$0xff] %vm32, 0.0
      %39 = vst.msk [vmem:[#allocation5] sm:$0xff] %vm32, 0.0
      %40 = vst.msk [vmem:[#allocation5 + $0x8] sm:$0xff] %vm32, 0.0
    $region17: #{tpu_custom_call.1} parent=1 // pred_fallthru
      _
    %s41 = smul.u32 0, 16
    %v42 = vlaneseq
    %v43 = vand.u32 %v42, 127
    %v44 = vadd.s32 %v43, 128
    %v45 = vadd.s32 %v43, 256
    %v46 = vadd.s32 %v43, 384
    %v47 = vadd.s32 %v43, 512
    %v48 = vadd.s32 %v43, 640
    %v49 = vadd.s32 %v43, 768
    %v50 = vlaneseq
    %v51 = vshrl.u32 %v50, 7
    %v52 = vadd.s32 %v51, 8
    %s53 = smul.u32 0, 7
    %s54 = smul.addr %s53, 8
    %s55 = scalar_lea.vmem [#allocation6], %s54
    %v56 = vld [vmem:[%s55] sm:$0xff]
    %v57 = vld [vmem:[%s55 + $0x8] sm:$0xff]
    %v58 = vld [vmem:[%s55 + $0x10] sm:$0xff]
    %v59 = vld [vmem:[%s55 + $0x18] sm:$0xff]
    %v60 = vld [vmem:[%s55 + $0x20] sm:$0xff]
    %v61 = vld [vmem:[%s55 + $0x28] sm:$0xff]
    %v62 = vld [vmem:[%s55 + $0x30] sm:$0xff]
    %v63 = vld [vmem:[%s55 + $0x38] sm:$0xff]
    %v64 = vld [vmem:[%s55 + $0x40] sm:$0xff]
    %v65 = vld [vmem:[%s55 + $0x48] sm:$0xff]
    %v66 = vld [vmem:[%s55 + $0x50] sm:$0xff]
    %v67 = vld [vmem:[%s55 + $0x58] sm:$0xff]
    %v68 = vld [vmem:[%s55 + $0x60] sm:$0xff]
    %v69 = vld [vmem:[%s55 + $0x68] sm:$0xff]
    %v70 = vld [vmem:[%s1] sm:$0xff]
    %v71 = vld [vmem:[%s1 + $0x8] sm:$0xff]
    %v72 = vstv %s41
    %v73 = vadd.s32 %v72, %v51
    %v74 = vadd.s32 %v72, %v52
    %vm75 = vcmp.lt.s32.totalorder %v73, 16
    %vm76 = vcmp.lt.s32.totalorder %v74, 16
    %v77 = vmax.f32 %v56, %v58
    %v78 = vmax.f32 %v57, %v59
    %v79 = vmax.f32 %v77, %v60
    %v80 = vmax.f32 %v78, %v61
    %vm81 = vcmask 48128
    %v82 = vsel %vm81, %v62, -inf
    %v83 = vmax.f32 %v79, %v82
    %v84 = vmax.f32 %v83, %v80
    %85 = vmax.xlane.f32.xlu0 %v84
    %v86 = vpop.xlane.xlu0 %85
    %v87 = vmax.f32 %v63, %v65
    %v88 = vmax.f32 %v64, %v66
    %v89 = vmax.f32 %v87, %v67
    %v90 = vmax.f32 %v88, %v68
    %v91 = vsel %vm81, %v69, -inf
    %v92 = vmax.f32 %v89, %v91
    %v93 = vmax.f32 %v92, %v90
    %94 = vmax.xlane.f32.xlu0 %v93
    %v95 = vpop.xlane.xlu0 %94
    %v96 = vsub.f32 %v56, %v86
    %v97 = vsub.f32 %v57, %v86
    %v98 = vsub.f32 %v58, %v86
    %v99 = vsub.f32 %v59, %v86
    %v100 = vsub.f32 %v60, %v86
    %v101 = vsub.f32 %v61, %v86
    %v102 = vsub.f32 %v62, %v86
    %v103 = vsub.f32 %v63, %v95
    %v104 = vsub.f32 %v64, %v95
    %v105 = vsub.f32 %v65, %v95
    %v106 = vsub.f32 %v66, %v95
    %v107 = vsub.f32 %v67, %v95
    %v108 = vsub.f32 %v68, %v95
    %v109 = vsub.f32 %v69, %v95
    %v110 = vmul.f32 %v96, 1.442695
    %v111 = vpow.pop %v110
    %v112 = vmul.f32 %v97, 1.442695
    %v113 = vpow.pop %v112
    %v114 = vmul.f32 %v98, 1.442695
    %v115 = vpow.pop %v114
    %v116 = vmul.f32 %v99, 1.442695
    %v117 = vpow.pop %v116
    %v118 = vmul.f32 %v100, 1.442695
    %v119 = vpow.pop %v118
    %v120 = vmul.f32 %v101, 1.442695
    %v121 = vpow.pop %v120
    %v122 = vmul.f32 %v102, 1.442695
    %v123 = vpow.pop %v122
    %v124 = vmul.f32 %v103, 1.442695
    %v125 = vpow.pop %v124
    %v126 = vmul.f32 %v104, 1.442695
    %v127 = vpow.pop %v126
    %v128 = vmul.f32 %v105, 1.442695
    %v129 = vpow.pop %v128
    %v130 = vmul.f32 %v106, 1.442695
    %v131 = vpow.pop %v130
    %v132 = vmul.f32 %v107, 1.442695
    %v133 = vpow.pop %v132
    %v134 = vmul.f32 %v108, 1.442695
    %v135 = vpow.pop %v134
    %v136 = vmul.f32 %v109, 1.442695
    %v137 = vpow.pop %v136
    %v138 = vadd.f32 %v111, %v113
    %v139 = vadd.f32 %v138, %v115
    %v140 = vadd.f32 %v139, %v117
    %v141 = vadd.f32 %v140, %v119
    %v142 = vadd.f32 %v141, %v121
    %v143 = vsel %vm81, %v123, 0.0
    %v144 = vadd.f32 %v142, %v143
    %145 = vadd.xlane.f32.xlu0 %v144
    %v146 = vpop.xlane.xlu0 %145
    %v147 = vadd.f32 %v125, %v127
    %v148 = vadd.f32 %v147, %v129
    %v149 = vadd.f32 %v148, %v131
    %v150 = vadd.f32 %v149, %v133
    %v151 = vadd.f32 %v150, %v135
    %v152 = vsel %vm81, %v137, 0.0
    %v153 = vadd.f32 %v151, %v152
    %154 = vadd.xlane.f32.xlu0 %v153
    %v155 = vpop.xlane.xlu0 %154
    %156 = vset.pattern.permute.xlu0 0
    %157 = vperm.xlu0 %156, %v70
    %v158 = vpop.permute.xlu0 %157
    %159 = vset.pattern.permute.xlu0 0
    %160 = vperm.xlu0 %159, %v71
    %v161 = vpop.permute.xlu0 %160
    %vm162 = vcmp.eq.s32.totalorder %v43, %v158
    %vm163 = vcmp.eq.s32.totalorder %v44, %v158
    %vm164 = vcmp.eq.s32.totalorder %v45, %v158
    %vm165 = vcmp.eq.s32.totalorder %v46, %v158
    %vm166 = vcmp.eq.s32.totalorder %v47, %v158
    %vm167 = vcmp.eq.s32.totalorder %v48, %v158
    %vm168 = vcmp.eq.s32.totalorder %v49, %v158
    %vm169 = vcmp.eq.s32.totalorder %v43, %v161
    %vm170 = vcmp.eq.s32.totalorder %v44, %v161
    %vm171 = vcmp.eq.s32.totalorder %v45, %v161
    %vm172 = vcmp.eq.s32.totalorder %v46, %v161
    %vm173 = vcmp.eq.s32.totalorder %v47, %v161
    %vm174 = vcmp.eq.s32.totalorder %v48, %v161
    %vm175 = vcmp.eq.s32.totalorder %v49, %v161
    %v176 = vsel %vm162, %v96, 0.0
    %v177 = vsel %vm163, %v97, 0.0
    %v178 = vsel %vm164, %v98, 0.0
    %v179 = vsel %vm165, %v99, 0.0
    %v180 = vsel %vm166, %v100, 0.0
    %v181 = vsel %vm167, %v101, 0.0
    %v182 = vsel %vm168, %v102, 0.0
    %v183 = vsel %vm169, %v103, 0.0
    %v184 = vsel %vm170, %v104, 0.0
    %v185 = vsel %vm171, %v105, 0.0
    %v186 = vsel %vm172, %v106, 0.0
    %v187 = vsel %vm173, %v107, 0.0
    %v188 = vsel %vm174, %v108, 0.0
    %v189 = vsel %vm175, %v109, 0.0
    %v190 = vadd.f32 %v176, %v177
    %v191 = vadd.f32 %v190, %v178
    %v192 = vadd.f32 %v191, %v179
    %v193 = vadd.f32 %v192, %v180
    %v194 = vadd.f32 %v193, %v181
    %v195 = vsel %vm81, %v182, 0.0
    %v196 = vadd.f32 %v194, %v195
    %197 = vadd.xlane.f32.xlu0 %v196
    %v198 = vpop.xlane.xlu0 %197
    %v199 = vadd.f32 %v183, %v184
    %v200 = vadd.f32 %v199, %v185
    %v201 = vadd.f32 %v200, %v186
    %v202 = vadd.f32 %v201, %v187
    %v203 = vadd.f32 %v202, %v188
    %v204 = vsel %vm81, %v189, 0.0
    %v205 = vadd.f32 %v203, %v204
    %206 = vadd.xlane.f32.xlu0 %v205
    %v207 = vpop.xlane.xlu0 %206
    %v208 = vlog2.pop %v146
    %v209 = vmul.f32 %v208, 0.6931472
    %v210 = vlog2.pop %v155
    %v211 = vmul.f32 %v210, 0.6931472
    %v212 = vsub.f32 %v209, %v198
    %v213 = vsub.f32 %v211, %v207
    %v214 = vsel %vm75, %v212, 0.0
    %v215 = vsel %vm76, %v213, 0.0
    %v216 = vadd.f32 %v214, 0.0
    %v217 = vadd.f32 %v215, 0.0
    %vm218 = vcmp.lt.s32.totalorder %v70, 128
    %vm219 = vcmp.lt.s32.totalorder %v71, 128
    %vm220 = vcmp.lt.s32.totalorder %v70, 256
    %vm221 = vcmp.lt.s32.totalorder %v71, 256
    %vm222 = vcmp.lt.s32.totalorder %v70, 768
    %vm223 = vcmp.lt.s32.totalorder %v71, 768
    %v224 = vsel %vm222, 2.0, 1.5
    %v225 = vsel %vm223, 2.0, 1.5
    %v226 = vsel %vm220, 2.1, %v224
    %v227 = vsel %vm221, 2.1, %v225
    %v228 = vsel %vm218, 3.0, %v226
    %v229 = vsel %vm219, 3.0, %v227
    %vm230 = vcmp.eq.s32.totalorder %v70, 260
    %vm231 = vcmp.eq.s32.totalorder %v71, 260
    %vm232 = vcmp.eq.s32.totalorder %v70, 264
    %vm233 = vcmp.eq.s32.totalorder %v71, 264
    %vm234 = vmor %vm230, %vm232
    %vm235 = vmor %vm231, %vm233
    %vm236 = vcmp.eq.s32.totalorder %v70, 272
    %vm237 = vcmp.eq.s32.totalorder %v71, 272
    %vm238 = vmor %vm234, %vm236
    %vm239 = vmor %vm235, %vm237
    %vm240 = vcmp.eq.s32.totalorder %v70, 288
    %vm241 = vcmp.eq.s32.totalorder %v71, 288
    %vm242 = vmor %vm238, %vm240
    %vm243 = vmor %vm239, %vm241
    %v244 = vmul.f32 %v228, 1.5
    %v245 = vmul.f32 %v229, 1.5
    %v246 = vsel %vm242, %v244, %v228
    %v247 = vsel %vm243, %v245, %v229
    %vm248 = vcmp.ge.s32.totalorder %v70, 0
    %vm249 = vcmp.ge.s32.totalorder %v71, 0
    %vm250 = vmand %vm248, %vm218
    %vm251 = vmand %vm249, %vm219
    %vm252 = vmand %vm75, %vm250
    %vm253 = vmand %vm76, %vm251
    %v254 = vsel %vm252, 1.0, 0.0
    %v255 = vsel %vm253, 1.0, 0.0
    %v256 = vmul.f32 %v214, %v246
    %v257 = vmul.f32 %v215, %v247
    %v258 = vadd.f32 %v256, 0.0
    %v259 = vadd.f32 %v257, 0.0
    %v260 = vmul.f32 %v214, %v254
    %v261 = vmul.f32 %v215, %v255
    %v262 = vadd.f32 %v260, 0.0
    %v263 = vadd.f32 %v261, 0.0
    %v264 = vadd.f32 %v254, 0.0
    %v265 = vadd.f32 %v255, 0.0
    %v266 = vld [vmem:[#allocation2] sm:$0xff]
    %v267 = vld [vmem:[#allocation2 + $0x8] sm:$0xff]
    %v268 = vadd.f32 %v266, %v216
    %v269 = vadd.f32 %v267, %v217
    %vm270 = vcmask 7168
    %271 = vst.msk [vmem:[#allocation2] sm:$0xff] %vm270, %v268
    %272 = vst.msk [vmem:[#allocation2 + $0x8] sm:$0xff] %vm270, %v269
    %v273 = vld [vmem:[#allocation3] sm:$0xff]
    %v274 = vld [vmem:[#allocation3 + $0x8] sm:$0xff]
    %v275 = vadd.f32 %v273, %v258
    %v276 = vadd.f32 %v274, %v259
    %277 = vst.msk [vmem:[#allocation3] sm:$0xff] %vm270, %v275
    %278 = vst.msk [vmem:[#allocation3 + $0x8] sm:$0xff] %vm270, %v276
    %v279 = vld [vmem:[#allocation4] sm:$0xff]
    %v280 = vld [vmem:[#allocation4 + $0x8] sm:$0xff]
    %v281 = vadd.f32 %v279, %v262
    %v282 = vadd.f32 %v280, %v263
    %283 = vst.msk [vmem:[#allocation4] sm:$0xff] %vm270, %v281
    %284 = vst.msk [vmem:[#allocation4 + $0x8] sm:$0xff] %vm270, %v282
    %v285 = vld [vmem:[#allocation5] sm:$0xff]
    %v286 = vld [vmem:[#allocation5 + $0x8] sm:$0xff]
    %v287 = vadd.f32 %v285, %v264
    %v288 = vadd.f32 %v286, %v265
    %289 = vst.msk [vmem:[#allocation5] sm:$0xff] %vm270, %v287
    %290 = vst.msk [vmem:[#allocation5 + $0x8] sm:$0xff] %vm270, %v288
    // Predicated region
    $region18: #{tpu_custom_call.1} parent=1 // pred_check
      %p291 = pneg %p28
    $region19: #{tpu_custom_call.1} parent=1 // pred_check_branch
      %293 = sbr.rel (%p291) target = $region21
    $region20: #{tpu_custom_call.1} parent=1 // pred_region
      %vm294 = vcmp.eq.s32.totalorder %v43, 0
      %v295 = vld [vmem:[#allocation2] sm:$0xff]
      %v296 = vld [vmem:[#allocation2 + $0x8] sm:$0xff]
      %v297 = vsel %vm270, %v295, 0.0
      %v298 = vsel %vm270, %v296, 0.0
      %v299 = vadd.f32 %v297, %v298
      %300 = vadd.xlane.f32.xlu0 %v299
      %v301 = vpop.xlane.xlu0 %300
      %v302 = vrot.slane %v301, 4
      %v303 = vadd.f32 %v301, %v302
      %v304 = vrot.slane %v303, 2
      %v305 = vadd.f32 %v303, %v304
      %v306 = vrot.slane %v305, 1
      %v307 = vadd.f32 %v305, %v306
      %s308 = vtos %v307
      %vm309 = vcmp.eq.s32.totalorder %v43, 1
      %v310 = vld [vmem:[#allocation3] sm:$0xff]
      %v311 = vld [vmem:[#allocation3 + $0x8] sm:$0xff]
      %v312 = vsel %vm270, %v310, 0.0
      %v313 = vsel %vm270, %v311, 0.0
      %v314 = vadd.f32 %v312, %v313
      %315 = vadd.xlane.f32.xlu0 %v314
      %v316 = vpop.xlane.xlu0 %315
      %v317 = vrot.slane %v316, 4
      %v318 = vadd.f32 %v316, %v317
      %v319 = vrot.slane %v318, 2
      %v320 = vadd.f32 %v318, %v319
      %v321 = vrot.slane %v320, 1
      %v322 = vadd.f32 %v320, %v321
      %s323 = vtos %v322
      %vm324 = vcmp.eq.s32.totalorder %v43, 2
      %v325 = vld [vmem:[#allocation4] sm:$0xff]
      %v326 = vld [vmem:[#allocation4 + $0x8] sm:$0xff]
      %v327 = vsel %vm270, %v325, 0.0
      %v328 = vsel %vm270, %v326, 0.0
      %v329 = vadd.f32 %v327, %v328
      %330 = vadd.xlane.f32.xlu0 %v329
      %v331 = vpop.xlane.xlu0 %330
      %v332 = vrot.slane %v331, 4
      %v333 = vadd.f32 %v331, %v332
      %v334 = vrot.slane %v333, 2
      %v335 = vadd.f32 %v333, %v334
      %v336 = vrot.slane %v335, 1
      %v337 = vadd.f32 %v335, %v336
      %s338 = vtos %v337
      %vm339 = vcmp.eq.s32.totalorder %v43, 3
      %v340 = vld [vmem:[#allocation5] sm:$0xff]
      %v341 = vld [vmem:[#allocation5 + $0x8] sm:$0xff]
      %v342 = vsel %vm270, %v340, 0.0
      %v343 = vsel %vm270, %v341, 0.0
      %v344 = vadd.f32 %v342, %v343
      %345 = vadd.xlane.f32.xlu0 %v344
      %v346 = vpop.xlane.xlu0 %345
      %v347 = vrot.slane %v346, 4
      %v348 = vadd.f32 %v346, %v347
      %v349 = vrot.slane %v348, 2
      %v350 = vadd.f32 %v348, %v349
      %v351 = vrot.slane %v350, 1
      %v352 = vadd.f32 %v350, %v351
      %s353 = vtos %v352
      %v354 = vstv %s353
      %v355 = vsel %vm339, %v354, 0.0
      %v356 = vstv %s338
      %v357 = vsel %vm324, %v356, %v355
      %v358 = vstv %s323
      %v359 = vsel %vm309, %v358, %v357
      %v360 = vstv %s308
      %v361 = vsel %vm294, %v360, %v359
      %362 = vst [vmem:[#allocation9] sm:$0xff] %v361
    $region21: #{tpu_custom_call.1} parent=1 // pred_fallthru
      _
    // Predicated region
    $region22: #{tpu_custom_call.1} parent=1 // pred_check
      _
    $region23: #{tpu_custom_call.1} parent=1 // pred_check_branch
      %364 = sbr.rel (0) target = $region25
    $region24: #{tpu_custom_call.1} parent=1 // pred_region
      %366 = vsyncadd [#allocation8], 0
      %s368 = sshll.u32 [#allocation9], 4
      %s369 = int_to_ptr.vmem [resolvable:$true] %s368
      %s370 = sshll.u32 %s2, 4
      %s371 = int_to_ptr.hbm [resolvable:$true] %s370
      %373 = dma.vmem_to_hbm [thread:$0]  %s369, 128, %s371, [#allocation8]
    $region25: #{tpu_custom_call.1} parent=1 // pred_fallthru
      _
    // Predicated region
    $region26: #{tpu_custom_call.1} parent=1 // pred_check
      _
    $region27: #{tpu_custom_call.1} parent=1 // pred_check_branch
      %375 = sbr.rel (0) target = $region29
    $region28: #{tpu_custom_call.1} parent=1 // pred_region
      %377 = dma.done [#allocation8], 128
    $region29: #{tpu_custom_call.1} parent=1 // pred_fallthru
      _
    %378 = vsyncpa [#allocation7], 1
    %379 = vsyncpa [#allocation8], 1

</llo_original>
